<compile_context>
chip_gen: v7x
topology: tpu7x:2x2x1
jax: 0.10.0
libtpu: 0.0.40
codegen_flags: <defaults>
</compile_context>

<pallas_src>
import functools

import jax
import jax.numpy as jnp
from jax.experimental import pallas as pl
from jax.experimental.pallas import tpu as pltpu


def _softplus(x):
    # numerically stable log(1 + exp(x)) == -logsigmoid(-x)
    return jnp.maximum(x, 0.0) + jnp.log1p(jnp.exp(-jnp.abs(x)))


def _gatne_loss_kernel(q_ref, c_ref, qn_ref, cn_ref, out_ref, *,
                       batch, inv_k, block_rows):
    i = pl.program_id(0)

    q = q_ref[...].astype(jnp.float32)      # (TB, D)
    c = c_ref[...].astype(jnp.float32)      # (TB, D)
    qn = qn_ref[...].astype(jnp.float32)    # (TB, K, D)
    cn = cn_ref[...].astype(jnp.float32)    # (TB, K, D)

    # score_Context(a, b) == sum over embedding dim of (a * b)
    pos_score = jnp.sum(q * c, axis=-1, keepdims=True)    # (TB, 1)
    neg_score = jnp.sum(qn * cn, axis=-1)                  # (TB, K)

    # Row validity masks (ragged last tile): zero padded-row scores BEFORE
    # softplus so out-of-bounds garbage can never turn into NaN/Inf, then
    # zero their contribution after softplus.
    base = i * block_rows
    row_p = jax.lax.broadcasted_iota(jnp.int32, pos_score.shape, 0) + base
    row_n = jax.lax.broadcasted_iota(jnp.int32, neg_score.shape, 0) + base
    valid_p = row_p < batch
    valid_n = row_n < batch

    pos_score = jnp.where(valid_p, pos_score, 0.0)
    neg_score = jnp.where(valid_n, neg_score, 0.0)

    # loss_pos = -logsigmoid(pos_score) = softplus(-pos_score)
    # loss_neg = mean_k(-logsigmoid(-neg_score)) = mean_k softplus(neg_score)
    loss_pos = jnp.where(valid_p, _softplus(-pos_score), 0.0)   # (TB, 1)
    loss_neg = jnp.where(valid_n, _softplus(neg_score), 0.0)    # (TB, K)

    # Per-block partial of  sum_b [ loss_pos_b + mean_k loss_neg_bk ]
    partial = jnp.sum(loss_pos) + inv_k * jnp.sum(loss_neg)

    # Lane-dense (1, 8, 128) block: full unmasked vector stores, no (1,1)
    # masked writeback. Wrapper reads element [:, 0, 0] of each block.
    out_ref[...] = jnp.full(out_ref.shape, partial, dtype=jnp.float32)


def embedding_loss_gatne(query_emb, query_emb_neg, ctx_emb, ctx_emb_neg,
                         *, block_rows=None):
    B, D = query_emb.shape
    Bn, K, Dn = query_emb_neg.shape
    assert (Bn, Dn) == (B, D)
    assert ctx_emb.shape == (B, D) and ctx_emb_neg.shape == (B, K, D)

    itemsize = jnp.dtype(query_emb.dtype).itemsize

    # Auto-size the row tile so the per-step working set (4 input tiles,
    # double-buffered) stays a few MiB — comfortably inside scoped VMEM on
    # v5e (16 MiB default), v6e (32 MiB) and v7x (32 MiB scoped / 64 MiB phys).
    if block_rows is None:
        bytes_per_row = (2 * D + 2 * K * D) * itemsize
        block_rows = max(8, min(1024, (4 * 1024 * 1024 // max(bytes_per_row, 1))
                                // 8 * 8))
    if block_rows >= B:
        tb = B                                 # single full-extent block
    else:
        tb = max(8, (block_rows // 8) * 8)     # sublane-aligned row tile
    num_blocks = pl.cdiv(B, tb)

    kernel = functools.partial(_gatne_loss_kernel,
                               batch=B, inv_k=1.0 / K, block_rows=tb)

    cost = pl.CostEstimate(
        flops=2 * B * D * (K + 1) + 8 * B * (K + 1),
        transcendentals=2 * B * (K + 1),
        bytes_accessed=(2 * B * D + 2 * B * K * D) * itemsize
                       + num_blocks * 8 * 128 * 4,
    )

    partials = pl.pallas_call(
        kernel,
        out_shape=jax.ShapeDtypeStruct((num_blocks, 8, 128), jnp.float32),
        grid=(num_blocks,),
        in_specs=[
            pl.BlockSpec((tb, D), lambda i: (i, 0)),          # query_emb
            pl.BlockSpec((tb, D), lambda i: (i, 0)),          # ctx_emb
            pl.BlockSpec((tb, K, D), lambda i: (i, 0, 0)),    # query_emb_neg
            pl.BlockSpec((tb, K, D), lambda i: (i, 0, 0)),    # ctx_emb_neg
        ],
        out_specs=pl.BlockSpec((1, 8, 128), lambda i: (i, 0, 0)),
        compiler_params=pltpu.CompilerParams(
            dimension_semantics=("parallel",),
            vmem_limit_bytes=32 * 1024 * 1024,
        ),
        cost_estimate=cost,
    )(query_emb, ctx_emb, query_emb_neg, ctx_emb_neg)

    # Tiny final reduction (one value per grid block) done by XLA.
    return (0.5 / B) * jnp.sum(partials[:, 0, 0])


def _reference_loss(query_emb, query_emb_neg, ctx_emb, ctx_emb_neg):
    # plain-JAX mirror of the PyTorch forward
    pos_score = jnp.sum(query_emb * ctx_emb, axis=-1)
    neg_score = jnp.sum(query_emb_neg * ctx_emb_neg, axis=-1)
    loss_pos = -jax.nn.log_sigmoid(pos_score)
    loss_neg = jnp.mean(-jax.nn.log_sigmoid(-neg_score), axis=1)
    return jnp.mean(0.5 * (loss_pos + loss_neg))


if __name__ == "__main__":
    B, K, D = 20, 5, 128   # batch, negatives per query, embedding dim

    key = jax.random.PRNGKey(0)
    k1, k2, k3, k4 = jax.random.split(key, 4)
    query_emb = jax.random.normal(k1, (B, D), dtype=jnp.float32)
    ctx_emb = jax.random.normal(k2, (B, D), dtype=jnp.float32)
    query_emb_neg = jax.random.normal(k3, (B, K, D), dtype=jnp.float32)
    ctx_emb_neg = jax.random.normal(k4, (B, K, D), dtype=jnp.float32)

    ref = _reference_loss(query_emb, query_emb_neg, ctx_emb, ctx_emb_neg)

    # Multi-block path with a ragged last tile (exercises grid + masking).
    loss_tiled = embedding_loss_gatne(query_emb, query_emb_neg, ctx_emb,
                                      ctx_emb_neg, block_rows=8)
    loss_tiled = jax.block_until_ready(loss_tiled)
    assert jnp.allclose(loss_tiled, ref, rtol=1e-5, atol=1e-5), (loss_tiled, ref)

    # Auto-tiled path (single block at this size).
    loss_auto = embedding_loss_gatne(query_emb, query_emb_neg,
                                     ctx_emb, ctx_emb_neg)
    loss_auto = jax.block_until_ready(loss_auto)
    assert jnp.allclose(loss_auto, ref, rtol=1e-5, atol=1e-5), (loss_auto, ref)

    print("KERNEL_OK")
</pallas_src>

<mosaic_0001>
module attributes {stable_mosaic.version = 11 : i64} {
  func.func @_gatne_loss_kernel(%arg0: i32, %arg1: memref<8x128xf32, #tpu.memory_space<vmem>>, %arg2: memref<8x128xf32, #tpu.memory_space<vmem>>, %arg3: memref<8x5x128xf32, #tpu.memory_space<vmem>>, %arg4: memref<8x5x128xf32, #tpu.memory_space<vmem>>, %arg5: memref<1x8x128xf32, #tpu.memory_space<vmem>>) attributes {dimension_semantics = [#tpu.dimension_semantics<parallel>], iteration_bounds = array<i64: 3>, scalar_prefetch = 0 : i64, scratch_operands = 0 : i64, tpu.core_type = #tpu.core_type<tc>, window_params = [{transform_indices = @transform_0, window_bounds = array<i64: 8, 128>}, {transform_indices = @transform_1, window_bounds = array<i64: 8, 128>}, {transform_indices = @transform_2, window_bounds = array<i64: 8, 5, 128>}, {transform_indices = @transform_3, window_bounds = array<i64: 8, 5, 128>}, {transform_indices = @transform_4, window_bounds = array<i64: 1, 8, 128>}]} {
    %c0 = arith.constant 0 : index
    %c0_0 = arith.constant 0 : index
    %0 = vector.load %arg1[%c0, %c0_0] : memref<8x128xf32, #tpu.memory_space<vmem>>, vector<8x128xf32>
    %c0_1 = arith.constant 0 : index
    %c0_2 = arith.constant 0 : index
    %1 = vector.load %arg2[%c0_1, %c0_2] : memref<8x128xf32, #tpu.memory_space<vmem>>, vector<8x128xf32>
    %c0_3 = arith.constant 0 : index
    %c0_4 = arith.constant 0 : index
    %c0_5 = arith.constant 0 : index
    %2 = vector.load %arg3[%c0_3, %c0_4, %c0_5] : memref<8x5x128xf32, #tpu.memory_space<vmem>>, vector<8x5x128xf32>
    %c0_6 = arith.constant 0 : index
    %c0_7 = arith.constant 0 : index
    %c0_8 = arith.constant 0 : index
    %3 = vector.load %arg4[%c0_6, %c0_7, %c0_8] : memref<8x5x128xf32, #tpu.memory_space<vmem>>, vector<8x5x128xf32>
    %4 = arith.mulf %0, %1 : vector<8x128xf32>
    %cst = arith.constant dense<0.000000e+00> : vector<8xf32>
    %5 = vector.multi_reduction <add>, %4, %cst [1] : vector<8x128xf32> to vector<8xf32>
    %6 = vector.shape_cast %5 : vector<8xf32> to vector<8x1xf32>
    %7 = arith.mulf %2, %3 : vector<8x5x128xf32>
    %cst_9 = arith.constant dense<0.000000e+00> : vector<8x5xf32>
    %8 = vector.multi_reduction <add>, %7, %cst_9 [2] : vector<8x5x128xf32> to vector<8x5xf32>
    %c8_i32 = arith.constant 8 : i32
    %9 = arith.muli %arg0, %c8_i32 : i32
    %10 = tpu.iota {dimensions = array<i32: 0>} : vector<8x1xi32>
    %11 = vector.broadcast %9 : i32 to vector<8x1xi32>
    %12 = arith.addi %10, %11 : vector<8x1xi32>
    %13 = tpu.iota {dimensions = array<i32: 0>} : vector<8x5xi32>
    %14 = vector.broadcast %9 : i32 to vector<8x5xi32>
    %15 = arith.addi %13, %14 : vector<8x5xi32>
    %c20_i32 = arith.constant 20 : i32
    %16 = vector.broadcast %c20_i32 : i32 to vector<8x1xi32>
    %17 = arith.cmpi slt, %12, %16 : vector<8x1xi32>
    %c20_i32_10 = arith.constant 20 : i32
    %18 = vector.broadcast %c20_i32_10 : i32 to vector<8x5xi32>
    %19 = arith.cmpi slt, %15, %18 : vector<8x5xi32>
    %cst_11 = arith.constant 0.000000e+00 : f32
    %20 = vector.broadcast %cst_11 : f32 to vector<8x1xf32>
    %21 = arith.select %17, %6, %20 : vector<8x1xi1>, vector<8x1xf32>
    %cst_12 = arith.constant 0.000000e+00 : f32
    %22 = vector.broadcast %cst_12 : f32 to vector<8x5xf32>
    %23 = arith.select %19, %8, %22 : vector<8x5xi1>, vector<8x5xf32>
    %cst_13 = arith.constant 0.000000e+00 : f32
    %24 = vector.broadcast %cst_13 : f32 to vector<8x1xf32>
    %25 = arith.subf %24, %21 : vector<8x1xf32>
    %cst_14 = arith.constant 0.000000e+00 : f32
    %26 = vector.broadcast %cst_14 : f32 to vector<8x1xf32>
    %27 = arith.maximumf %25, %26 : vector<8x1xf32>
    %28 = math.absf %25 : vector<8x1xf32>
    %cst_15 = arith.constant 0.000000e+00 : f32
    %29 = vector.broadcast %cst_15 : f32 to vector<8x1xf32>
    %30 = arith.subf %29, %28 : vector<8x1xf32>
    %31 = math.exp %30 : vector<8x1xf32>
    %32 = math.log1p %31 : vector<8x1xf32>
    %33 = arith.addf %27, %32 : vector<8x1xf32>
    %cst_16 = arith.constant 0.000000e+00 : f32
    %34 = vector.broadcast %cst_16 : f32 to vector<8x1xf32>
    %35 = arith.select %17, %33, %34 : vector<8x1xi1>, vector<8x1xf32>
    %cst_17 = arith.constant 0.000000e+00 : f32
    %36 = vector.broadcast %cst_17 : f32 to vector<8x5xf32>
    %37 = arith.maximumf %23, %36 : vector<8x5xf32>
    %38 = math.absf %23 : vector<8x5xf32>
    %cst_18 = arith.constant 0.000000e+00 : f32
    %39 = vector.broadcast %cst_18 : f32 to vector<8x5xf32>
    %40 = arith.subf %39, %38 : vector<8x5xf32>
    %41 = math.exp %40 : vector<8x5xf32>
    %42 = math.log1p %41 : vector<8x5xf32>
    %43 = arith.addf %37, %42 : vector<8x5xf32>
    %cst_19 = arith.constant 0.000000e+00 : f32
    %44 = vector.broadcast %cst_19 : f32 to vector<8x5xf32>
    %45 = arith.select %19, %43, %44 : vector<8x5xi1>, vector<8x5xf32>
    %46 = vector.shape_cast %35 : vector<8x1xf32> to vector<1x8x1xf32>
    %cst_20 = arith.constant dense<0.000000e+00> : vector<1xf32>
    %47 = vector.multi_reduction <add>, %46, %cst_20 [1, 2] : vector<1x8x1xf32> to vector<1xf32>
    %48 = vector.shape_cast %47 : vector<1xf32> to vector<1x1x1xf32>
    %49 = vector.extract %48[0, 0, 0] : f32 from vector<1x1x1xf32>
    %50 = vector.shape_cast %45 : vector<8x5xf32> to vector<1x8x5xf32>
    %cst_21 = arith.constant dense<0.000000e+00> : vector<1xf32>
    %51 = vector.multi_reduction <add>, %50, %cst_21 [1, 2] : vector<1x8x5xf32> to vector<1xf32>
    %52 = vector.shape_cast %51 : vector<1xf32> to vector<1x1x1xf32>
    %53 = vector.extract %52[0, 0, 0] : f32 from vector<1x1x1xf32>
    %cst_22 = arith.constant 2.000000e-01 : f32
    %54 = arith.mulf %cst_22, %53 : f32
    %55 = arith.addf %49, %54 : f32
    %56 = vector.broadcast %55 : f32 to vector<1x8x128xf32>
    %c0_23 = arith.constant 0 : index
    %c0_24 = arith.constant 0 : index
    %c0_25 = arith.constant 0 : index
    %57 = vector.load %arg5[%c0_23, %c0_24, %c0_25] : memref<1x8x128xf32, #tpu.memory_space<vmem>>, vector<1x8x128xf32>
    tpu.vector_store %arg5[%c0_23, %c0_24, %c0_25], %56 {strides = array<i32>} : memref<1x8x128xf32, #tpu.memory_space<vmem>>, vector<1x8x128xf32>,
    return
  }
  func.func @transform_0(%arg0: i32) -> (i32, i32) {
    %c0_i32 = arith.constant 0 : i32
    %c0_i32_0 = arith.constant 0 : i32
    return %arg0, %c0_i32 : i32, i32
  }
  func.func @transform_1(%arg0: i32) -> (i32, i32) {
    %c0_i32 = arith.constant 0 : i32
    %c0_i32_0 = arith.constant 0 : i32
    return %arg0, %c0_i32 : i32, i32
  }
  func.func @transform_2(%arg0: i32) -> (i32, i32, i32) {
    %c0_i32 = arith.constant 0 : i32
    %c0_i32_0 = arith.constant 0 : i32
    %c0_i32_1 = arith.constant 0 : i32
    return %arg0, %c0_i32, %c0_i32_0 : i32, i32, i32
  }
  func.func @transform_3(%arg0: i32) -> (i32, i32, i32) {
    %c0_i32 = arith.constant 0 : i32
    %c0_i32_0 = arith.constant 0 : i32
    %c0_i32_1 = arith.constant 0 : i32
    return %arg0, %c0_i32, %c0_i32_0 : i32, i32, i32
  }
  func.func @transform_4(%arg0: i32) -> (i32, i32, i32) {
    %c0_i32 = arith.constant 0 : i32
    %c0_i32_0 = arith.constant 0 : i32
    %c0_i32_1 = arith.constant 0 : i32
    return %arg0, %c0_i32, %c0_i32_0 : i32, i32, i32
  }
}

</mosaic_0001>

<llo_original>
// kernel: tpu_custom_call.1
$region0: #{tpu_custom_call.1}
  #allocation0 [shape = 'u32[]', space=smem, size = 0x4, offset = 0x4, fixed_abs, tag = 'smem constant byte address 0x4 - core index']
  #allocation1 [shape = 'u32[144,128]{1,0:T(1,128)}', space=vmem, size = 0x12000, scoped, tag = 'internal scratch']
  %s0 = inlined_call_operand.vmem [shape: f32[20,128], index: 0, kind: input, shape index: {}]
  %s1 = inlined_call_operand.vmem [shape: f32[20,128], index: 1, kind: input, shape index: {}]
  %s2 = inlined_call_operand.vmem [shape: f32[20,5,128], index: 2, kind: input, shape index: {}]
  %s3 = inlined_call_operand.vmem [shape: f32[20,5,128], index: 3, kind: input, shape index: {}]
  %s4 = inlined_call_operand.hbm [shape: f32[3,8,128], index: 4, kind: output, shape index: {}]
  %s5 = sld [smem:[#allocation0]]
  $region49: #{tpu_custom_call.1} parent=0
    _
  %s7 = ssub.s32 1, %s5
  %s8 = scalar_select 0, %s7, %s5
  $region1: #{tpu_custom_call.1} parent=0
    #allocation2 [shape = 'u8[8192]{0}', space=vmem, size = 0x2000, scoped, tag = 'output window, operand 0']
    #allocation3 [shape = 's32[2]{0}', space=sflag, size = 0x8, scoped, tag = 'scoped memory for tpu_custom_call.1']
    %9 = vsyncpa [#allocation3], 0
    %s10 = scalar_lea.sflag [#allocation3], 1
    %11 = vsyncpa %s10, 0
    loop: start=0, step=1, limit=5
    $region2: #{tpu_custom_call.1} parent=1 // loop_pre_header
      _
    $region3: #{tpu_custom_call.1} parent=1 // loop_header
      %s13 = sphi 0, %s17
      %p14 = scmp.ge.s32.totalorder %s13, 5
      %s23 = sphi 0, %s25
      %s26 = sphi 0, %s23
      %s27 = sphi 0, %s26
      %s43 = sphi 0, %s27
      %s49 = sphi 0, %s51
      %s52 = sphi 0, %s49
      %s53 = sphi 0, %s52
      %s69 = sphi 0, %s53
      %s75 = sphi 0, %s77
      %s78 = sphi 0, %s75
      %s79 = sphi 0, %s78
      %s95 = sphi 0, %s79
      %s101 = sphi 0, %s103
      %s104 = sphi 0, %s101
      %s105 = sphi 0, %s104
      %s121 = sphi 0, %s105
      %s127 = sphi 0, %s129
      %s130 = sphi 0, %s127
      %s131 = sphi 0, %s130
      %s147 = sphi 0, %s131
    $region4: #{tpu_custom_call.1} parent=1 // loop_header_branch
      %16 = sbr.rel (%p14) target = $region8
    $region5: #{tpu_custom_call.1} parent=1 // loop_body
      %s18 = ssub.s32 %s13, 1
      %s19 = ssub.s32 %s13, 2
      %s20 = sadd.s32 %s13, 1
      %s21 = ssub.s32 %s13, %s20
      %p22 = scmp.eq.s32.totalorder %s21, 0
      %s24 = sadd.s32 %s23, 1
      %s25 = scalar_select %p22, %s23, %s24
      %p28 = pneg %p22
      %p29 = scmp.eq.s32.totalorder %s13, 2
      %p30 = por %p28, %p29
      %p31 = scmp.ne.s32.totalorder %s23, %s26
      %p32 = scmp.eq.s32.totalorder %s13, 0
      %p33 = por %p31, %p32
      %p34 = scmp.ne.s32.totalorder %s23, %s26
      %p35 = scmp.eq.s32.totalorder %s18, 2
      %p36 = por %p34, %p35
      %p37 = scmp.ne.s32.totalorder %s26, %s27
      %p38 = scmp.eq.s32.totalorder %s18, 0
      %p39 = por %p37, %p38
      %p40 = scmp.ne.s32.totalorder %s26, %s27
      %p41 = scmp.eq.s32.totalorder %s19, 2
      %p42 = por %p40, %p41
      %p44 = scmp.ne.s32.totalorder %s27, %s43
      %p45 = scmp.eq.s32.totalorder %s19, 0
      %p46 = por %p44, %p45
      %s47 = ssub.s32 %s13, %s20
      %p48 = scmp.eq.s32.totalorder %s47, 0
      %s50 = sadd.s32 %s49, 1
      %s51 = scalar_select %p48, %s49, %s50
      %p54 = pneg %p48
      %p55 = scmp.eq.s32.totalorder %s13, 2
      %p56 = por %p54, %p55
      %p57 = scmp.ne.s32.totalorder %s49, %s52
      %p58 = scmp.eq.s32.totalorder %s13, 0
      %p59 = por %p57, %p58
      %p60 = scmp.ne.s32.totalorder %s49, %s52
      %p61 = scmp.eq.s32.totalorder %s18, 2
      %p62 = por %p60, %p61
      %p63 = scmp.ne.s32.totalorder %s52, %s53
      %p64 = scmp.eq.s32.totalorder %s18, 0
      %p65 = por %p63, %p64
      %p66 = scmp.ne.s32.totalorder %s52, %s53
      %p67 = scmp.eq.s32.totalorder %s19, 2
      %p68 = por %p66, %p67
      %p70 = scmp.ne.s32.totalorder %s53, %s69
      %p71 = scmp.eq.s32.totalorder %s19, 0
      %p72 = por %p70, %p71
      %s73 = ssub.s32 %s13, %s20
      %p74 = scmp.eq.s32.totalorder %s73, 0
      %s76 = sadd.s32 %s75, 1
      %s77 = scalar_select %p74, %s75, %s76
      %p80 = pneg %p74
      %p81 = scmp.eq.s32.totalorder %s13, 2
      %p82 = por %p80, %p81
      %p83 = scmp.ne.s32.totalorder %s75, %s78
      %p84 = scmp.eq.s32.totalorder %s13, 0
      %p85 = por %p83, %p84
      %p86 = scmp.ne.s32.totalorder %s75, %s78
      %p87 = scmp.eq.s32.totalorder %s18, 2
      %p88 = por %p86, %p87
      %p89 = scmp.ne.s32.totalorder %s78, %s79
      %p90 = scmp.eq.s32.totalorder %s18, 0
      %p91 = por %p89, %p90
      %p92 = scmp.ne.s32.totalorder %s78, %s79
      %p93 = scmp.eq.s32.totalorder %s19, 2
      %p94 = por %p92, %p93
      %p96 = scmp.ne.s32.totalorder %s79, %s95
      %p97 = scmp.eq.s32.totalorder %s19, 0
      %p98 = por %p96, %p97
      %s99 = ssub.s32 %s13, %s20
      %p100 = scmp.eq.s32.totalorder %s99, 0
      %s102 = sadd.s32 %s101, 1
      %s103 = scalar_select %p100, %s101, %s102
      %p106 = pneg %p100
      %p107 = scmp.eq.s32.totalorder %s13, 2
      %p108 = por %p106, %p107
      %p109 = scmp.ne.s32.totalorder %s101, %s104
      %p110 = scmp.eq.s32.totalorder %s13, 0
      %p111 = por %p109, %p110
      %p112 = scmp.ne.s32.totalorder %s101, %s104
      %p113 = scmp.eq.s32.totalorder %s18, 2
      %p114 = por %p112, %p113
      %p115 = scmp.ne.s32.totalorder %s104, %s105
      %p116 = scmp.eq.s32.totalorder %s18, 0
      %p117 = por %p115, %p116
      %p118 = scmp.ne.s32.totalorder %s104, %s105
      %p119 = scmp.eq.s32.totalorder %s19, 2
      %p120 = por %p118, %p119
      %p122 = scmp.ne.s32.totalorder %s105, %s121
      %p123 = scmp.eq.s32.totalorder %s19, 0
      %p124 = por %p122, %p123
      %s125 = ssub.s32 %s13, %s20
      %p126 = scmp.eq.s32.totalorder %s125, 0
      %s128 = sadd.s32 %s127, 1
      %s129 = scalar_select %p126, %s127, %s128
      %p132 = pneg %p126
      %p133 = scmp.eq.s32.totalorder %s13, 2
      %p134 = por %p132, %p133
      %p135 = scmp.ne.s32.totalorder %s127, %s130
      %p136 = scmp.eq.s32.totalorder %s13, 0
      %p137 = por %p135, %p136
      %p138 = scmp.ne.s32.totalorder %s127, %s130
      %p139 = scmp.eq.s32.totalorder %s18, 2
      %p140 = por %p138, %p139
      %p141 = scmp.ne.s32.totalorder %s130, %s131
      %p142 = scmp.eq.s32.totalorder %s18, 0
      %p143 = por %p141, %p142
      %p144 = scmp.ne.s32.totalorder %s130, %s131
      %p145 = scmp.eq.s32.totalorder %s19, 2
      %p146 = por %p144, %p145
      %p148 = scmp.ne.s32.totalorder %s131, %s147
      %p149 = scmp.eq.s32.totalorder %s19, 0
      %p150 = por %p148, %p149
      %p151 = scmp.le.s32.totalorder 1, %s13
      %p152 = scmp.lt.s32.totalorder %s13, 4
      %p153 = pnand %p151, %p152
      %p154 = pneg %p153
      // Predicated region
      $region9: #{tpu_custom_call.1} parent=5 // pred_check
        _
      $region10: #{tpu_custom_call.1} parent=5 // pred_check_branch
        %156 = sbr.rel (%p153) target = $region12
      $region11: #{tpu_custom_call.1} parent=5 // pred_region
        %s157 = ssub.s32 %s13, 1
      $region12: #{tpu_custom_call.1} parent=5 // pred_fallthru
        _
      %p158 = scmp.lt.s32.totalorder %s13, 3
      // Predicated region
      $region13: #{tpu_custom_call.1} parent=5 // pred_check
        %p159 = pneg %p158
      $region14: #{tpu_custom_call.1} parent=5 // pred_check_branch
        %161 = sbr.rel (%p159) target = $region16
      $region15: #{tpu_custom_call.1} parent=5 // pred_region
        // Predicated region
        $region17: #{tpu_custom_call.1} parent=15 // pred_check
          %p162 = pneg %p33
        $region18: #{tpu_custom_call.1} parent=15 // pred_check_branch
          %164 = sbr.rel (%p162) target = $region20
        $region19: #{tpu_custom_call.1} parent=15 // pred_region
          %p165 = scmp.lt.s32.totalorder %s13, 2
          %s166 = scalar_select %p165, %s13, 2
          %s167 = smul.addr %s166, 8
          %s168 = scalar_lea.vmem %s0, %s167
        $region20: #{tpu_custom_call.1} parent=15 // pred_fallthru
          _
        // Predicated region
        $region21: #{tpu_custom_call.1} parent=15 // pred_check
          %p169 = pneg %p59
        $region22: #{tpu_custom_call.1} parent=15 // pred_check_branch
          %171 = sbr.rel (%p169) target = $region24
        $region23: #{tpu_custom_call.1} parent=15 // pred_region
          %p172 = scmp.lt.s32.totalorder %s13, 2
          %s173 = scalar_select %p172, %s13, 2
          %s174 = smul.addr %s173, 8
          %s175 = scalar_lea.vmem %s1, %s174
        $region24: #{tpu_custom_call.1} parent=15 // pred_fallthru
          _
        // Predicated region
        $region25: #{tpu_custom_call.1} parent=15 // pred_check
          %p176 = pneg %p85
        $region26: #{tpu_custom_call.1} parent=15 // pred_check_branch
          %178 = sbr.rel (%p176) target = $region28
        $region27: #{tpu_custom_call.1} parent=15 // pred_region
          %s179 = smul.u32 8, %s13
          %s180 = ssub.s32 20, %s179
          %p181 = scmp.lt.s32.totalorder %s180, 8
          %s182 = scalar_select %p181, %s180, 8
          %s183 = smul.u32 128, %s182
          %p184 = scmp.lt.s32.totalorder %s179, 19
          %s185 = scalar_select %p184, %s179, 19
          %s186 = smul.addr %s185, 8
          %s187 = scalar_lea.vmem %s2, %s186
          %s188 = smul.u32 8, %s13
          %s189 = ssub.s32 20, %s188
          %p190 = scmp.lt.s32.totalorder %s189, 8
          %s191 = scalar_select %p190, %s189, 8
          %s192 = smul.u32 128, %s191
        $region28: #{tpu_custom_call.1} parent=15 // pred_fallthru
          _
        // Predicated region
        $region29: #{tpu_custom_call.1} parent=15 // pred_check
          %p193 = pneg %p111
        $region30: #{tpu_custom_call.1} parent=15 // pred_check_branch
          %195 = sbr.rel (%p193) target = $region32
        $region31: #{tpu_custom_call.1} parent=15 // pred_region
          %s196 = smul.u32 8, %s13
          %s197 = ssub.s32 20, %s196
          %p198 = scmp.lt.s32.totalorder %s197, 8
          %s199 = scalar_select %p198, %s197, 8
          %s200 = smul.u32 128, %s199
          %p201 = scmp.lt.s32.totalorder %s196, 19
          %s202 = scalar_select %p201, %s196, 19
          %s203 = smul.addr %s202, 8
          %s204 = scalar_lea.vmem %s3, %s203
          %s205 = smul.u32 8, %s13
          %s206 = ssub.s32 20, %s205
          %p207 = scmp.lt.s32.totalorder %s206, 8
          %s208 = scalar_select %p207, %s206, 8
          %s209 = smul.u32 128, %s208
        $region32: #{tpu_custom_call.1} parent=15 // pred_fallthru
          _
      $region16: #{tpu_custom_call.1} parent=5 // pred_fallthru
        _
      %p210 = scmp.le.s32.totalorder 1, %s13
      %p211 = scmp.lt.s32.totalorder %s13, 4
      %p212 = pnand %p210, %p211
      %p213 = pneg %p212
      // Predicated region
      $region33: #{tpu_custom_call.1} parent=5 // pred_check
        _
      $region34: #{tpu_custom_call.1} parent=5 // pred_check_branch
        %215 = sbr.rel (%p212) target = $region36
      $region35: #{tpu_custom_call.1} parent=5 // pred_region
        %s216 = ssub.s32 %s13, 1
        %p217 = scmp.lt.s32.totalorder %s18, 2
        %s218 = scalar_select %p217, %s18, 2
        %s219 = smul.addr %s218, 8
        %s220 = scalar_lea.vmem %s0, %s219
        %p221 = pneg %p39
        %p222 = pneg %p36
        %p223 = scmp.lt.s32.totalorder %s18, 2
        %s224 = scalar_select %p223, %s18, 2
        %s225 = smul.addr %s224, 8
        %s226 = scalar_lea.vmem %s1, %s225
        %p227 = pneg %p65
        %p228 = pneg %p62
        %s229 = smul.u32 8, %s18
        %s230 = ssub.s32 20, %s229
        %p231 = scmp.lt.s32.totalorder %s230, 8
        %s232 = scalar_select %p231, %s230, 8
        %s233 = smul.u32 128, %s232
        %p234 = scmp.lt.s32.totalorder %s229, 19
        %s235 = scalar_select %p234, %s229, 19
        %s236 = smul.addr %s235, 8
        %s237 = scalar_lea.vmem %s2, %s236
        %p238 = pneg %p91
        %p239 = pneg %p88
        %s240 = smul.u32 8, %s18
        %s241 = ssub.s32 20, %s240
        %p242 = scmp.lt.s32.totalorder %s241, 8
        %s243 = scalar_select %p242, %s241, 8
        %s244 = smul.u32 128, %s243
        %p245 = scmp.lt.s32.totalorder %s240, 19
        %s246 = scalar_select %p245, %s240, 19
        %s247 = smul.addr %s246, 8
        %s248 = scalar_lea.vmem %s3, %s247
        %p249 = pneg %p117
        %p250 = pneg %p114
        %p251 = pneg %p143
        %p252 = pneg %p140
        %s253 = sand.u32 %s130, 1
        %s254 = scalar_lea.sflag [#allocation3], %s253
        %s255 = sand.u32 %s130, 1
        %s256 = smul.addr %s255, 8
        %s257 = scalar_lea.vmem [#allocation2], %s256
        %p258 = scmp.lt.s32.totalorder %s18, 2
        %s259 = scalar_select %p258, %s18, 2
        %s260 = smul.addr %s259, 8
        %s261 = scalar_lea.vmem %s0, %s260
        %p262 = scmp.lt.s32.totalorder %s18, 2
        %s263 = scalar_select %p262, %s18, 2
        %s264 = smul.addr %s263, 8
        %s265 = scalar_lea.vmem %s1, %s264
        %s266 = smul.u32 8, %s18
        %s267 = ssub.s32 20, %s266
        %p268 = scmp.lt.s32.totalorder %s267, 8
        %s269 = scalar_select %p268, %s267, 8
        %s270 = smul.u32 128, %s269
        %p271 = scmp.lt.s32.totalorder %s266, 19
        %s272 = scalar_select %p271, %s266, 19
        %s273 = smul.addr %s272, 8
        %s274 = scalar_lea.vmem %s2, %s273
        %s275 = smul.u32 8, %s18
        %s276 = ssub.s32 20, %s275
        %p277 = scmp.lt.s32.totalorder %s276, 8
        %s278 = scalar_select %p277, %s276, 8
        %s279 = smul.u32 128, %s278
        %s280 = smul.u32 8, %s18
        %s281 = ssub.s32 20, %s280
        %p282 = scmp.lt.s32.totalorder %s281, 8
        %s283 = scalar_select %p282, %s281, 8
        %s284 = smul.u32 128, %s283
        %p285 = scmp.lt.s32.totalorder %s280, 19
        %s286 = scalar_select %p285, %s280, 19
        %s287 = smul.addr %s286, 8
        %s288 = scalar_lea.vmem %s3, %s287
        %s289 = smul.u32 8, %s18
        %s290 = ssub.s32 20, %s289
        %p291 = scmp.lt.s32.totalorder %s290, 8
        %s292 = scalar_select %p291, %s290, 8
        %s293 = smul.u32 128, %s292
        %v294 = vld [vmem:[%s261] sm:$0xff]
        %v295 = vld [vmem:[%s265] sm:$0xff]
        %v296 = vld [vmem:[%s274] sm:$0x1f]
        %v297 = vld [vmem:[%s274 + $0x8] sm:$0x1f]
        %v298 = vld [vmem:[%s274 + $0x10] sm:$0x1f]
        %v299 = vld [vmem:[%s274 + $0x18] sm:$0x1f]
        %v300 = vld [vmem:[%s274 + $0x20] sm:$0x1f]
        %v301 = vld [vmem:[%s274 + $0x28] sm:$0x1f]
        %v302 = vld [vmem:[%s274 + $0x30] sm:$0x1f]
        %v303 = vld [vmem:[%s274 + $0x38] sm:$0x1f]
        %v304 = vld [vmem:[%s288] sm:$0x1f]
        %v305 = vld [vmem:[%s288 + $0x8] sm:$0x1f]
        %v306 = vld [vmem:[%s288 + $0x10] sm:$0x1f]
        %v307 = vld [vmem:[%s288 + $0x18] sm:$0x1f]
        %v308 = vld [vmem:[%s288 + $0x20] sm:$0x1f]
        %v309 = vld [vmem:[%s288 + $0x28] sm:$0x1f]
        %v310 = vld [vmem:[%s288 + $0x30] sm:$0x1f]
        %v311 = vld [vmem:[%s288 + $0x38] sm:$0x1f]
        %v312 = vmul.f32 %v294, %v295
        %313 = vadd.xlane.f32.xlu0 %v312
        %v314 = vpop.xlane.xlu0 %313
        %v315 = vmul.f32 %v296, %v304
        %v316 = vmul.f32 %v297, %v305
        %v317 = vmul.f32 %v298, %v306
        %v318 = vmul.f32 %v299, %v307
        %v319 = vmul.f32 %v300, %v308
        %v320 = vmul.f32 %v301, %v309
        %v321 = vmul.f32 %v302, %v310
        %v322 = vmul.f32 %v303, %v311
        %vm323 = vcmask 1044480
        %v324 = vsel %vm323, %v315, 0.0
        %325 = vadd.xlane.f32.xlu0 %v324
        %v326 = vpop.xlane.xlu0 %325
        %v327 = vsel %vm323, %v316, 0.0
        %328 = vadd.xlane.f32.xlu0 %v327
        %v329 = vpop.xlane.xlu0 %328
        %v330 = vsel %vm323, %v317, 0.0
        %331 = vadd.xlane.f32.xlu0 %v330
        %v332 = vpop.xlane.xlu0 %331
        %v333 = vsel %vm323, %v318, 0.0
        %334 = vadd.xlane.f32.xlu0 %v333
        %v335 = vpop.xlane.xlu0 %334
        %v336 = vsel %vm323, %v319, 0.0
        %337 = vadd.xlane.f32.xlu0 %v336
        %v338 = vpop.xlane.xlu0 %337
        %v339 = vsel %vm323, %v320, 0.0
        %340 = vadd.xlane.f32.xlu0 %v339
        %v341 = vpop.xlane.xlu0 %340
        %v342 = vsel %vm323, %v321, 0.0
        %343 = vadd.xlane.f32.xlu0 %v342
        %v344 = vpop.xlane.xlu0 %343
        %v345 = vsel %vm323, %v322, 0.0
        %346 = vadd.xlane.f32.xlu0 %v345
        %v347 = vpop.xlane.xlu0 %346
        %s348 = smul.u32 %s18, 8
        %v349 = vlaneseq
        %v350 = vshrl.u32 %v349, 7
        %v351 = vstv %s348
        %v352 = vadd.s32 %v350, %v351
        %vm353 = vcmp.lt.s32.totalorder %v352, 20
        %v354 = vsel %vm353, %v314, 0.0
        %v363 = vlaneseq
        %v364 = vand.u32 %v363, 127
        %v365 = vlaneseq
        %v366 = vshrl.u32 %v365, 7
        %v367 = vsub.s32 %v364, %v366
        %v368 = vrot.slane %v326, %v367
        %v369 = vlaneseq
        %v370 = vshrl.u32 %v369, 7
        %v371 = vsub.s32 %v364, %v370
        %v372 = vrot.slane %v329, %v371
        %v373 = vlaneseq
        %v374 = vshrl.u32 %v373, 7
        %v375 = vsub.s32 %v364, %v374
        %v376 = vrot.slane %v332, %v375
        %v377 = vlaneseq
        %v378 = vshrl.u32 %v377, 7
        %v379 = vsub.s32 %v364, %v378
        %v380 = vrot.slane %v335, %v379
        %v381 = vlaneseq
        %v382 = vshrl.u32 %v381, 7
        %v383 = vsub.s32 %v364, %v382
        %v384 = vrot.slane %v338, %v383
        %v385 = vlaneseq
        %v386 = vshrl.u32 %v385, 7
        %v387 = vsub.s32 %v364, %v386
        %v388 = vrot.slane %v341, %v387
        %v389 = vlaneseq
        %v390 = vshrl.u32 %v389, 7
        %v391 = vsub.s32 %v364, %v390
        %v392 = vrot.slane %v344, %v391
        %v393 = vlaneseq
        %v394 = vshrl.u32 %v393, 7
        %v395 = vsub.s32 %v364, %v394
        %v396 = vrot.slane %v347, %v395
        %vm397 = vcmask 1041409
        %v398 = vsel %vm397, %v372, %v368
        %vm399 = vcmask 1042434
        %v400 = vsel %vm399, %v376, %v398
        %vm401 = vcmask 1043459
        %v402 = vsel %vm401, %v380, %v400
        %vm403 = vcmask 1044484
        %v404 = vsel %vm403, %v384, %v402
        %vm405 = vcmask 1045509
        %v406 = vsel %vm405, %v388, %v404
        %vm407 = vcmask 1046534
        %v408 = vsel %vm407, %v392, %v406
        %vm409 = vcmask 1047559
        %v410 = vsel %vm409, %v396, %v408
        %v412 = vsel %vm353, %v410, 0.0
        %v413 = vsub.f32 0.0, %v354
        %v414 = vmax.f32 %v413, 0.0
        %v415 = vand.u32 2147483647, %v413
        %v416 = vsub.f32 0.0, %v415
        %v417 = vmul.f32 %v416, 1.442695
        %v418 = vpow.pop %v417
        %v419 = vadd.f32 %v418, 1.0
        %v420 = vlog2.pop %v419
        %v421 = vmul.f32 %v420, 0.6931472
        %v422 = vmul.f32 -0.5, %v418
        %v423 = vadd.f32 %v422, 1.0
        %v424 = vmul.f32 %v423, %v418
        %v425 = vand.u32 2147483647, %v418
        %vm426 = vcmp.lt.f32.partialorder %v425, 0.0004427343
        %v427 = vsel %vm426, %v424, %v421
        %v428 = vadd.f32 %v414, %v427
        %v429 = vsel %vm353, %v428, 0.0
        %v430 = vmax.f32 %v412, 0.0
        %v431 = vand.u32 2147483647, %v412
        %v432 = vsub.f32 0.0, %v431
        %v433 = vmul.f32 %v432, 1.442695
        %v434 = vpow.pop %v433
        %v435 = vadd.f32 %v434, 1.0
        %v436 = vlog2.pop %v435
        %v437 = vmul.f32 %v436, 0.6931472
        %v438 = vmul.f32 -0.5, %v434
        %v439 = vadd.f32 %v438, 1.0
        %v440 = vmul.f32 %v439, %v434
        %v441 = vand.u32 2147483647, %v434
        %vm442 = vcmp.lt.f32.partialorder %v441, 0.0004427343
        %v443 = vsel %vm442, %v440, %v437
        %v444 = vadd.f32 %v430, %v443
        %v445 = vsel %vm353, %v444, 0.0
        %vm446 = vcmask 7168
        %v447 = vsel %vm446, %v429, 0.0
        %448 = vadd.xlane.f32.xlu0 %v447
        %v449 = vpop.xlane.xlu0 %448
        %v450 = vrot.slane %v449, 4
        %v451 = vadd.f32 %v449, %v450
        %v452 = vrot.slane %v451, 2
        %v453 = vadd.f32 %v451, %v452
        %v454 = vrot.slane %v453, 1
        %v455 = vadd.f32 %v453, %v454
        %s456 = vtos %v455
        %vm457 = vcmask 39936
        %v458 = vsel %vm457, %v445, 0.0
        %459 = vadd.xlane.f32.xlu0 %v458
        %v460 = vpop.xlane.xlu0 %459
        %v461 = vrot.slane %v460, 4
        %v462 = vadd.f32 %v460, %v461
        %v463 = vrot.slane %v462, 2
        %v464 = vadd.f32 %v462, %v463
        %v465 = vrot.slane %v464, 1
        %v466 = vadd.f32 %v464, %v465
        %s467 = vtos %v466
        %s468 = smul.f32 %s467, 0.2
        %s469 = sadd.f32 %s456, %s468
        %v470 = vstv %s469
        %471 = vst [vmem:[%s257] sm:$0xff] %v470
        %s472 = sand.u32 %s130, 1
        %s473 = scalar_lea.sflag [#allocation3], %s472
        %s474 = sand.u32 %s130, 1
        %s475 = smul.addr %s474, 8
        %s476 = scalar_lea.vmem [#allocation2], %s475
        // Predicated region
        $region37: #{tpu_custom_call.1} parent=35 // pred_check
          %p477 = pneg %p140
        $region38: #{tpu_custom_call.1} parent=35 // pred_check_branch
          %479 = sbr.rel (%p477) target = $region40
        $region39: #{tpu_custom_call.1} parent=35 // pred_region
          %s481 = ssub.s32 128, 128
          %482 = vsyncadd %s473, %s481
          %s483 = smul.addr %s18, 128
          %s484 = scalar_lea.hbm %s4, %s483
          %s486 = sshll.u32 %s476, 4
          %s487 = int_to_ptr.vmem [resolvable:$true] %s486
          %489 = dma.vmem_to_hbm [thread:$0]  %s487, 128, %s484, %s473
        $region40: #{tpu_custom_call.1} parent=35 // pred_fallthru
          _
      $region36: #{tpu_custom_call.1} parent=5 // pred_fallthru
        _
      %p490 = scmp.le.s32.totalorder 2, %s13
      // Predicated region
      $region41: #{tpu_custom_call.1} parent=5 // pred_check
        %p491 = pneg %p490
      $region42: #{tpu_custom_call.1} parent=5 // pred_check_branch
        %493 = sbr.rel (%p491) target = $region44
      $region43: #{tpu_custom_call.1} parent=5 // pred_region
        %s494 = ssub.s32 %s13, 2
        // Predicated region
        $region45: #{tpu_custom_call.1} parent=43 // pred_check
          %p495 = pneg %p146
        $region46: #{tpu_custom_call.1} parent=43 // pred_check_branch
          %497 = sbr.rel (%p495) target = $region48
        $region47: #{tpu_custom_call.1} parent=43 // pred_region
          %s498 = sand.u32 %s131, 1
          %s499 = scalar_lea.sflag [#allocation3], %s498
          %s500 = sand.u32 %s131, 1
          %s501 = smul.addr %s500, 8
          %s502 = scalar_lea.vmem [#allocation2], %s501
          %503 = dma.done %s499, 128
        $region48: #{tpu_custom_call.1} parent=43 // pred_fallthru
          _
      $region44: #{tpu_custom_call.1} parent=5 // pred_fallthru
        _
    $region6: #{tpu_custom_call.1} parent=1 // loop_footer
      %s17 = sadd.s32 1, %s13
    $region7: #{tpu_custom_call.1} parent=1 // loop_footer_branch
      %12 = sbr.rel target = $region3
    $region8: #{tpu_custom_call.1} parent=1 // loop_exit
      _
    %504 = vsyncpa [#allocation3], 1
    %s505 = scalar_lea.sflag [#allocation3], 1
    %506 = vsyncpa %s505, 1

</llo_original>
